<compile_context>
chip_gen: v6e
topology: v6e:2x2x1
jax: 0.10.0
libtpu: 0.0.40
codegen_flags: <defaults>
</compile_context>

<pallas_src>
import functools

import jax
import jax.numpy as jnp
from jax import lax
from jax.experimental import pallas as pl
from jax.experimental.pallas import tpu as pltpu


def _round_up(a: int, b: int) -> int:
    return ((a + b - 1) // b) * b


# ----------------------------------------------------------------------------
# Kernel: fused conv (4 space-to-depth offset matmuls) + bias (+ folded
# nearest residual) on one (batch, h-tile) block.
# ----------------------------------------------------------------------------
def _residual_conv_kernel(xa_ref, xb_ref, w_ref, b_ref, o_ref, *, th, wo_p, c4, cout):
    # xa_ref: (1, th, S_w, 4*Cin) bf16  th s2d rows of this h-tile
    # xb_ref: (1, 1,  S_w, 4*Cin) bf16  1-row halo (s2d row h0 + th)
    # w_ref : (4, 4*Cin, Cout)    bf16  conv weight per (dh, dw) offset,
    #                                   nearest-residual one-hot folded into block 0
    # b_ref : (1, Cout)           f32   conv bias
    # o_ref : (1, th, Wo_p, Cout) f32   output tile (NHWC, unpadded channels)
    m = th * wo_p

    # Halo handled with a single outer-dim concat (VMEM-local, HBM-bound kernel).
    x_all = jnp.concatenate([xa_ref[0], xb_ref[0]], axis=0)     # (th+1, S_w, 4*Cin)

    acc = jnp.zeros((m, cout), jnp.float32)
    for idx in range(4):                                        # static unroll
        dh, dw = idx // 2, idx % 2
        lhs = x_all[dh:dh + th, dw:dw + wo_p, :]                # (th, wo_p, 4*Cin) bf16
        # wo_p % 8 == 0 -> merging (th, wo_p) keeps the sublane layout intact.
        lhs = lhs.reshape(m, c4)
        acc = acc + jnp.dot(lhs, w_ref[idx],
                            preferred_element_type=jnp.float32)

    acc = acc + b_ref[...]                                      # fp32 epilogue
    o_ref[...] = acc.reshape(1, th, wo_p, cout)


# ----------------------------------------------------------------------------
# Wrapper: layout plumbing (NCHW -> bf16 s2d, weight regrouping + residual fold)
# ----------------------------------------------------------------------------
def residual_forward(x, weight, bias, *, th=None, channels_last=False):
    """Residual(Conv2d(Cin, Cout, 3, stride=2, padding=1)) forward.

    x: (B, Cin, H, W) NCHW. Returns NCHW (PyTorch parity); pass
    channels_last=True to take the kernel's native NHWC output and skip the
    final transpose pass over HBM.
    """
    B, Cin, H, W = x.shape
    Cout = weight.shape[0]
    if H % 2 or W % 2:
        # TODO(synk): odd H/W need per-row nearest indices (floor(ho*H/Ho) != 2*ho)
        # and (H+1)//2 conv output; only the even-spatial path is implemented.
        raise NotImplementedError("residual_forward expects even spatial dims")
    Ho, Wo = H // 2, W // 2
    C4 = 4 * Cin

    Wo_p = _round_up(Wo, 8)              # aligned output width (extra cols cropped)
    S_w = Wo_p + 1                       # +1 col-pair halo for the dw=1 taps

    # --- row tile: big M tile (th*Wo_p ~ 1024), keep >= ~4 grid steps if possible
    if th is None:
        th = max(1, min(Ho, max(1, 1024 // Wo_p)))
        while th > 1 and B * ((Ho + th - 1) // th) < 4:
            th = (th + 1) // 2
    n_h = (Ho + th - 1) // th
    Ho_pad = n_h * th
    S_h = Ho_pad + 1                     # +1 row halo

    # --- bf16 space-to-depth packing of the zero-padded NHWC input -----------
    # padded rows r in [0, 2*S_h), cols c in [0, 2*S_w):
    #   s2d[b, r//2, c//2, (r%2)*2*Cin + (c%2)*Cin + cc] == x_padded[b, r, c, cc]
    xt = jnp.transpose(x.astype(jnp.bfloat16), (0, 2, 3, 1))             # NHWC bf16
    xp = jnp.pad(xt, ((0, 0), (1, 2 * S_h - 1 - H), (1, 2 * S_w - 1 - W), (0, 0)))
    s2d = (xp.reshape(B, S_h, 2, S_w, 2, Cin)
             .transpose(0, 1, 3, 2, 4, 5)
             .reshape(B, S_h, S_w, C4))

    # --- conv weights regrouped per (dh, dw) offset over s2d channels --------
    w_f = weight.astype(jnp.float32)
    blocks = []
    for dh in (0, 1):
        for dw in (0, 1):
            quads = []
            for qh in (0, 1):
                for qw in (0, 1):
                    kh, kw = 2 * dh + qh, 2 * dw + qw
                    if kh < 3 and kw < 3:
                        quads.append(w_f[:, :, kh, kw].T)                # (Cin, Cout)
                    else:
                        quads.append(jnp.zeros((Cin, Cout), jnp.float32))
            blocks.append(jnp.concatenate(quads, axis=0))                # (4*Cin, Cout)
    # Fold the nearest-neighbour residual into the centre-tap quadrant of the
    # (dh, dw) = (0, 0) block: out[co, ho, wo] += x[idx_c[co], 2*ho, 2*wo].
    idx_c = (jnp.arange(Cout) * Cin) // Cout                             # floor(co*Cin/Cout)
    e_fold = jnp.zeros((Cin, Cout), jnp.float32).at[idx_c, jnp.arange(Cout)].set(1.0)
    blocks[0] = blocks[0].at[3 * Cin:4 * Cin, :].add(e_fold)
    w_s2d = jnp.stack(blocks, axis=0).astype(jnp.bfloat16)               # (4, 4*Cin, Cout)

    b_row = bias.astype(jnp.float32).reshape(1, Cout)

    kernel = functools.partial(_residual_conv_kernel,
                               th=th, wo_p=Wo_p, c4=C4, cout=Cout)

    # VMEM budget: double-buffered x/halo/out blocks + resident weights/bias +
    # in-kernel temporaries, with lane(128)/sublane(8) padding accounted for.
    c4_l, co_l = _round_up(C4, 128), _round_up(Cout, 128)
    sw_s, wo_s = _round_up(S_w, 8), _round_up(Wo_p, 8)
    x_blk = th * sw_s * c4_l * 2
    halo_blk = 8 * c4_l * 2
    out_blk = th * wo_s * co_l * 4
    const_blk = 4 * _round_up(C4, 8) * co_l * 2 + 8 * co_l * 4
    temps = 4 * x_blk + 2 * th * wo_s * co_l * 4
    vmem_need = 2 * (x_blk + halo_blk + out_blk + const_blk) + temps
    vmem_limit = int(max(32 << 20, min(56 << 20, vmem_need + (4 << 20))))

    out = pl.pallas_call(
        kernel,
        out_shape=jax.ShapeDtypeStruct((B, Ho_pad, Wo_p, Cout), jnp.float32),
        grid_spec=pltpu.PrefetchScalarGridSpec(
            num_scalar_prefetch=0,
            grid=(B, n_h),
            in_specs=[
                # th s2d rows of this h-tile
                pl.BlockSpec((1, th, S_w, C4), lambda b, h: (b, h, 0, 0)),
                # 1-row halo: block size 1 on the row dim => block idx == row idx
                pl.BlockSpec((1, 1, S_w, C4), lambda b, h: (b, (h + 1) * th, 0, 0)),
                pl.BlockSpec((4, C4, Cout), lambda b, h: (0, 0, 0)),
                pl.BlockSpec((1, Cout), lambda b, h: (0, 0)),
            ],
            out_specs=pl.BlockSpec((1, th, Wo_p, Cout), lambda b, h: (b, h, 0, 0)),
        ),
        compiler_params=pltpu.CompilerParams(
            dimension_semantics=("parallel", "parallel"),
            vmem_limit_bytes=vmem_limit,
        ),
    )(s2d, s2d, w_s2d, b_row)

    out = out[:, :Ho, :Wo, :]                 # drop h/w padding
    if channels_last:
        return out                            # NHWC, no extra HBM pass
    return jnp.transpose(out, (0, 3, 1, 2))   # PyTorch NCHW parity


# ----------------------------------------------------------------------------
# Pure-JAX references
# ----------------------------------------------------------------------------
def residual_reference(x, weight, bias, *, emulate_kernel=False):
    B, Cin, H, W = x.shape
    Cout = weight.shape[0]
    Ho, Wo = H // 2, W // 2
    idx_c = (jnp.arange(Cout) * Cin) // Cout
    if emulate_kernel:
        # exactly what the kernel computes: bf16 x, bf16 folded weights,
        # fp32 accumulation, fp32 bias.
        xe = x.astype(jnp.bfloat16).astype(jnp.float32)
        wf = weight.astype(jnp.float32).at[jnp.arange(Cout), idx_c, 1, 1].add(1.0)
        we = wf.astype(jnp.bfloat16).astype(jnp.float32)
        n = lax.conv_general_dilated(
            xe, we, window_strides=(2, 2), padding=((1, 1), (1, 1)),
            dimension_numbers=("NCHW", "OIHW", "NCHW"),
            precision=lax.Precision.HIGHEST)
        return n + bias.reshape(1, Cout, 1, 1)
    # exact fp32 PyTorch semantics
    n = lax.conv_general_dilated(
        x, weight, window_strides=(2, 2), padding=((1, 1), (1, 1)),
        dimension_numbers=("NCHW", "OIHW", "NCHW"),
        precision=lax.Precision.HIGHEST) + bias.reshape(1, Cout, 1, 1)
    idx_h = (jnp.arange(Ho) * H) // Ho
    idx_w = (jnp.arange(Wo) * W) // Wo
    r = x[:, idx_c][:, :, idx_h][:, :, :, idx_w]
    return r + n


if __name__ == "__main__":
    key = jax.random.PRNGKey(0)
    kx, kw, kb = jax.random.split(key, 3)

    B, Cin, H, W = 2, 4, 16, 16
    Cout = 8

    x = jax.random.normal(kx, (B, Cin, H, W), dtype=jnp.float32)
    weight = jax.random.normal(kw, (Cout, Cin, 3, 3), dtype=jnp.float32) * 0.1
    bias = jax.random.normal(kb, (Cout,), dtype=jnp.float32) * 0.1

    out = jax.jit(residual_forward)(x, weight, bias)
    out = jax.block_until_ready(out)
    assert out.shape == (B, Cout, H // 2, W // 2)

    # tight check vs a reference using the kernel's exact bf16 numerics
    ref_tight = residual_reference(x, weight, bias, emulate_kernel=True)
    assert jnp.allclose(out, ref_tight, atol=2e-3, rtol=2e-3), \
        float(jnp.max(jnp.abs(out - ref_tight)))
    # loose check vs the exact fp32 PyTorch semantics
    ref_f32 = residual_reference(x, weight, bias)
    assert jnp.allclose(out, ref_f32, atol=5e-2, rtol=5e-2), \
        float(jnp.max(jnp.abs(out - ref_f32)))

    print("KERNEL_OK")
</pallas_src>

<mosaic_0001>
module attributes {stable_mosaic.version = 11 : i64} {
  func.func @_residual_conv_kernel(%arg0: i32, %arg1: i32, %arg2: memref<1x4x9x16xbf16, #tpu.memory_space<vmem>>, %arg3: memref<1x1x9x16xbf16, #tpu.memory_space<vmem>>, %arg4: memref<4x16x8xbf16, #tpu.memory_space<vmem>>, %arg5: memref<1x8xf32, #tpu.memory_space<vmem>>, %arg6: memref<1x4x8x8xf32, #tpu.memory_space<vmem>>) attributes {dimension_semantics = [#tpu.dimension_semantics<parallel>, #tpu.dimension_semantics<parallel>], iteration_bounds = array<i64: 2, 2>, scalar_prefetch = 0 : i64, scratch_operands = 0 : i64, tpu.core_type = #tpu.core_type<tc>, window_params = [{transform_indices = @transform_0, window_bounds = array<i64: 1, 4, 9, 16>}, {transform_indices = @transform_1, window_bounds = array<i64: 1, 1, 9, 16>}, {pipeline_mode = #tpu.pipeline_mode<synchronous>, transform_indices = @transform_2, window_bounds = array<i64: 4, 16, 8>}, {pipeline_mode = #tpu.pipeline_mode<synchronous>, transform_indices = @transform_3, window_bounds = array<i64: 1, 8>}, {transform_indices = @transform_4, window_bounds = array<i64: 1, 4, 8, 8>}]} {
    %c0 = arith.constant 0 : index
    %c0_0 = arith.constant 0 : index
    %c0_1 = arith.constant 0 : index
    %c0_2 = arith.constant 0 : index
    %0 = vector.load %arg2[%c0, %c0_0, %c0_1, %c0_2] : memref<1x4x9x16xbf16, #tpu.memory_space<vmem>>, vector<1x4x9x16xbf16>
    %1 = vector.shape_cast %0 : vector<1x4x9x16xbf16> to vector<4x9x16xbf16>
    %c0_3 = arith.constant 0 : index
    %c0_4 = arith.constant 0 : index
    %c0_5 = arith.constant 0 : index
    %c0_6 = arith.constant 0 : index
    %2 = vector.load %arg3[%c0_3, %c0_4, %c0_5, %c0_6] : memref<1x1x9x16xbf16, #tpu.memory_space<vmem>>, vector<1x1x9x16xbf16>
    %3 = vector.shape_cast %2 : vector<1x1x9x16xbf16> to vector<1x9x16xbf16>
    %4 = tpu.concatenate %1, %3 in 0 : vector<4x9x16xbf16>, vector<1x9x16xbf16> -> vector<5x9x16xbf16>
    %cst = arith.constant 0.000000e+00 : f32
    %5 = vector.broadcast %cst : f32 to vector<32x8xf32>
    %6 = vector.extract_strided_slice %4 {offsets = [0, 0, 0], sizes = [4, 8, 16], strides = [1, 1, 1]} : vector<5x9x16xbf16> to vector<4x8x16xbf16>
    %7 = vector.shape_cast %6 : vector<4x8x16xbf16> to vector<32x16xbf16>
    %c0_7 = arith.constant 0 : index
    %c0_8 = arith.constant 0 : index
    %c0_9 = arith.constant 0 : index
    %8 = vector.load %arg4[%c0_7, %c0_8, %c0_9] : memref<4x16x8xbf16, #tpu.memory_space<vmem>>, vector<1x16x8xbf16>
    %9 = vector.shape_cast %8 : vector<1x16x8xbf16> to vector<16x8xbf16>
    %cst_10 = arith.constant dense<0.000000e+00> : vector<32x8xf32>
    %10 = tpu.matmul %7, %9, %cst_10 {dimension_numbers = #tpu.dot_dimension_numbers<[1], [0], [0], [1], [0, 0, 1, 1], [], []>} : vector<32x16xbf16>, vector<16x8xbf16>, vector<32x8xf32> -> vector<32x8xf32>
    %11 = arith.addf %5, %10 : vector<32x8xf32>
    %12 = vector.extract_strided_slice %4 {offsets = [0, 1, 0], sizes = [4, 8, 16], strides = [1, 1, 1]} : vector<5x9x16xbf16> to vector<4x8x16xbf16>
    %13 = vector.shape_cast %12 : vector<4x8x16xbf16> to vector<32x16xbf16>
    %c1 = arith.constant 1 : index
    %c0_11 = arith.constant 0 : index
    %c0_12 = arith.constant 0 : index
    %14 = vector.load %arg4[%c1, %c0_11, %c0_12] : memref<4x16x8xbf16, #tpu.memory_space<vmem>>, vector<1x16x8xbf16>
    %15 = vector.shape_cast %14 : vector<1x16x8xbf16> to vector<16x8xbf16>
    %cst_13 = arith.constant dense<0.000000e+00> : vector<32x8xf32>
    %16 = tpu.matmul %13, %15, %cst_13 {dimension_numbers = #tpu.dot_dimension_numbers<[1], [0], [0], [1], [0, 0, 1, 1], [], []>} : vector<32x16xbf16>, vector<16x8xbf16>, vector<32x8xf32> -> vector<32x8xf32>
    %17 = arith.addf %11, %16 : vector<32x8xf32>
    %18 = vector.extract_strided_slice %4 {offsets = [1, 0, 0], sizes = [4, 8, 16], strides = [1, 1, 1]} : vector<5x9x16xbf16> to vector<4x8x16xbf16>
    %19 = vector.shape_cast %18 : vector<4x8x16xbf16> to vector<32x16xbf16>
    %c2 = arith.constant 2 : index
    %c0_14 = arith.constant 0 : index
    %c0_15 = arith.constant 0 : index
    %20 = vector.load %arg4[%c2, %c0_14, %c0_15] : memref<4x16x8xbf16, #tpu.memory_space<vmem>>, vector<1x16x8xbf16>
    %21 = vector.shape_cast %20 : vector<1x16x8xbf16> to vector<16x8xbf16>
    %cst_16 = arith.constant dense<0.000000e+00> : vector<32x8xf32>
    %22 = tpu.matmul %19, %21, %cst_16 {dimension_numbers = #tpu.dot_dimension_numbers<[1], [0], [0], [1], [0, 0, 1, 1], [], []>} : vector<32x16xbf16>, vector<16x8xbf16>, vector<32x8xf32> -> vector<32x8xf32>
    %23 = arith.addf %17, %22 : vector<32x8xf32>
    %24 = vector.extract_strided_slice %4 {offsets = [1, 1, 0], sizes = [4, 8, 16], strides = [1, 1, 1]} : vector<5x9x16xbf16> to vector<4x8x16xbf16>
    %25 = vector.shape_cast %24 : vector<4x8x16xbf16> to vector<32x16xbf16>
    %c3 = arith.constant 3 : index
    %c0_17 = arith.constant 0 : index
    %c0_18 = arith.constant 0 : index
    %26 = vector.load %arg4[%c3, %c0_17, %c0_18] : memref<4x16x8xbf16, #tpu.memory_space<vmem>>, vector<1x16x8xbf16>
    %27 = vector.shape_cast %26 : vector<1x16x8xbf16> to vector<16x8xbf16>
    %cst_19 = arith.constant dense<0.000000e+00> : vector<32x8xf32>
    %28 = tpu.matmul %25, %27, %cst_19 {dimension_numbers = #tpu.dot_dimension_numbers<[1], [0], [0], [1], [0, 0, 1, 1], [], []>} : vector<32x16xbf16>, vector<16x8xbf16>, vector<32x8xf32> -> vector<32x8xf32>
    %29 = arith.addf %23, %28 : vector<32x8xf32>
    %c0_20 = arith.constant 0 : index
    %c0_21 = arith.constant 0 : index
    %30 = vector.load %arg5[%c0_20, %c0_21] : memref<1x8xf32, #tpu.memory_space<vmem>>, vector<1x8xf32>
    %31 = vector.broadcast %30 : vector<1x8xf32> to vector<32x8xf32>
    %32 = arith.addf %29, %31 : vector<32x8xf32>
    %33 = vector.shape_cast %32 : vector<32x8xf32> to vector<1x4x8x8xf32>
    %c0_22 = arith.constant 0 : index
    %c0_23 = arith.constant 0 : index
    %c0_24 = arith.constant 0 : index
    %c0_25 = arith.constant 0 : index
    %34 = vector.load %arg6[%c0_22, %c0_23, %c0_24, %c0_25] : memref<1x4x8x8xf32, #tpu.memory_space<vmem>>, vector<1x4x8x8xf32>
    tpu.vector_store %arg6[%c0_22, %c0_23, %c0_24, %c0_25], %33 {strides = array<i32>} : memref<1x4x8x8xf32, #tpu.memory_space<vmem>>, vector<1x4x8x8xf32>,
    return
  }
  func.func @transform_0(%arg0: i32, %arg1: i32) -> (i32, i32, i32, i32) {
    %c0_i32 = arith.constant 0 : i32
    %c0_i32_0 = arith.constant 0 : i32
    %c0_i32_1 = arith.constant 0 : i32
    return %arg0, %arg1, %c0_i32, %c0_i32_0 : i32, i32, i32, i32
  }
  func.func @transform_1(%arg0: i32, %arg1: i32) -> (i32, i32, i32, i32) {
    %c1_i32 = arith.constant 1 : i32
    %0 = arith.addi %arg1, %c1_i32 : i32
    %c4_i32 = arith.constant 4 : i32
    %1 = arith.muli %0, %c4_i32 : i32
    %c0_i32 = arith.constant 0 : i32
    %c0_i32_0 = arith.constant 0 : i32
    %c0_i32_1 = arith.constant 0 : i32
    return %arg0, %1, %c0_i32, %c0_i32_0 : i32, i32, i32, i32
  }
  func.func @transform_2(%arg0: i32, %arg1: i32) -> (i32, i32, i32) {
    %c0_i32 = arith.constant 0 : i32
    %c0_i32_0 = arith.constant 0 : i32
    %c0_i32_1 = arith.constant 0 : i32
    %c0_i32_2 = arith.constant 0 : i32
    return %c0_i32, %c0_i32_0, %c0_i32_1 : i32, i32, i32
  }
  func.func @transform_3(%arg0: i32, %arg1: i32) -> (i32, i32) {
    %c0_i32 = arith.constant 0 : i32
    %c0_i32_0 = arith.constant 0 : i32
    %c0_i32_1 = arith.constant 0 : i32
    return %c0_i32, %c0_i32_0 : i32, i32
  }
  func.func @transform_4(%arg0: i32, %arg1: i32) -> (i32, i32, i32, i32) {
    %c0_i32 = arith.constant 0 : i32
    %c0_i32_0 = arith.constant 0 : i32
    %c0_i32_1 = arith.constant 0 : i32
    return %arg0, %arg1, %c0_i32, %c0_i32_0 : i32, i32, i32, i32
  }
}

</mosaic_0001>

<llo_original>
// kernel: residual_forward.1
$region0: #{residual_forward.1}
  #allocation0 [shape = 'u32[]', space=smem, size = 0x4, offset = 0x4, fixed_abs, tag = 'smem constant byte address 0x4 - core index']
  #allocation1 [shape = 'u32[144,128]{1,0:T(1,128)}', space=vmem, size = 0x12000, scoped, tag = 'internal scratch']
  %s0 = inlined_call_operand.vmem [shape: bf16[2,9,9,16], index: 0, kind: input, shape index: {}, may-alias: {0,1}]
  %s1 = inlined_call_operand.vmem [shape: bf16[2,9,9,16], index: 1, kind: input, shape index: {}, may-alias: {0,1}]
  %s2 = inlined_call_operand.vmem [shape: bf16[4,16,8], index: 2, kind: input, shape index: {}]
  %s3 = inlined_call_operand.vmem [shape: f32[1,8], index: 3, kind: input, shape index: {}]
  %s4 = inlined_call_operand.vmem [shape: f32[2,8,8,8], index: 4, kind: output, shape index: {}]
  %s5 = sld [smem:[#allocation0]]
  $region49: #{residual_forward.1} parent=0
    _
  %s7 = ssub.s32 1, %s5
  %s8 = scalar_select 0, %s7, %s5
  loop: start=0, step=1, limit=6
  $region2: #{residual_forward.1} parent=0 // loop_pre_header
    _
  $region3: #{residual_forward.1} parent=0 // loop_header
    %s10 = sphi 0, %s14
    %p11 = scmp.ge.s32.totalorder %s10, 6
    %s17 = sphi 0, %s29
    %s18 = sphi 0, %s25
    %s19 = sphi 0, %s17
    %s20 = sphi 0, %s18
    %s21 = sphi 0, %s19
    %s22 = sphi 0, %s20
    %s34 = sphi 0, %s36
    %s37 = sphi 0, %s34
    %s38 = sphi 0, %s37
    %s54 = sphi 0, %s38
    %s66 = sphi 0, %s68
    %s69 = sphi 0, %s66
    %s70 = sphi 0, %s69
    %s86 = sphi 0, %s70
    %s90 = sphi 0, %s90
    %s92 = sphi 0, %s90
    %s93 = sphi 0, %s92
    %s107 = sphi 0, %s93
    %s111 = sphi 0, %s111
    %s113 = sphi 0, %s111
    %s114 = sphi 0, %s113
    %s128 = sphi 0, %s114
    %s136 = sphi 0, %s138
    %s139 = sphi 0, %s136
    %s140 = sphi 0, %s139
    %s156 = sphi 0, %s140
  $region4: #{residual_forward.1} parent=0 // loop_header_branch
    %13 = sbr.rel (%p11) target = $region8
  $region5: #{residual_forward.1} parent=0 // loop_body
    %s15 = ssub.s32 %s10, 1
    %s16 = ssub.s32 %s10, 2
    %s23 = sadd.s32 1, %s18
    %p24 = scmp.ge.s32.totalorder %s23, 2
    %s25 = scalar_select %p24, 0, %s23
    %s26 = sadd.s32 1, %s17
    %s27 = scalar_select %p24, %s26, %s17
    %p28 = scmp.ge.s32.totalorder %s27, 2
    %s29 = scalar_select %p28, 0, %s27
    %s30 = ssub.s32 %s17, %s29
    %s31 = ssub.s32 %s18, %s25
    %s32 = sor.u32 %s30, %s31
    %p33 = scmp.eq.s32.totalorder %s32, 0
    %s35 = sadd.s32 %s34, 1
    %s36 = scalar_select %p33, %s34, %s35
    %p39 = pneg %p33
    %p40 = scmp.eq.s32.totalorder %s10, 3
    %p41 = por %p39, %p40
    %p42 = scmp.ne.s32.totalorder %s34, %s37
    %p43 = scmp.eq.s32.totalorder %s10, 0
    %p44 = por %p42, %p43
    %p45 = scmp.ne.s32.totalorder %s34, %s37
    %p46 = scmp.eq.s32.totalorder %s15, 3
    %p47 = por %p45, %p46
    %p48 = scmp.ne.s32.totalorder %s37, %s38
    %p49 = scmp.eq.s32.totalorder %s15, 0
    %p50 = por %p48, %p49
    %p51 = scmp.ne.s32.totalorder %s37, %s38
    %p52 = scmp.eq.s32.totalorder %s16, 3
    %p53 = por %p51, %p52
    %p55 = scmp.ne.s32.totalorder %s38, %s54
    %p56 = scmp.eq.s32.totalorder %s16, 0
    %p57 = por %p55, %p56
    %s58 = sadd.s32 %s18, 1
    %s59 = smul.u32 %s58, 4
    %s60 = sadd.s32 %s25, 1
    %s61 = smul.u32 %s60, 4
    %s62 = ssub.s32 %s17, %s29
    %s63 = ssub.s32 %s59, %s61
    %s64 = sor.u32 %s62, %s63
    %p65 = scmp.eq.s32.totalorder %s64, 0
    %s67 = sadd.s32 %s66, 1
    %s68 = scalar_select %p65, %s66, %s67
    %p71 = pneg %p65
    %p72 = scmp.eq.s32.totalorder %s10, 3
    %p73 = por %p71, %p72
    %p74 = scmp.ne.s32.totalorder %s66, %s69
    %p75 = scmp.eq.s32.totalorder %s10, 0
    %p76 = por %p74, %p75
    %p77 = scmp.ne.s32.totalorder %s66, %s69
    %p78 = scmp.eq.s32.totalorder %s15, 3
    %p79 = por %p77, %p78
    %p80 = scmp.ne.s32.totalorder %s69, %s70
    %p81 = scmp.eq.s32.totalorder %s15, 0
    %p82 = por %p80, %p81
    %p83 = scmp.ne.s32.totalorder %s69, %s70
    %p84 = scmp.eq.s32.totalorder %s16, 3
    %p85 = por %p83, %p84
    %p87 = scmp.ne.s32.totalorder %s70, %s86
    %p88 = scmp.eq.s32.totalorder %s16, 0
    %p89 = por %p87, %p88
    %s91 = sadd.s32 %s90, 1
    %p94 = scmp.eq.s32.totalorder %s10, 3
    %p95 = scmp.ne.s32.totalorder %s90, %s92
    %p96 = scmp.eq.s32.totalorder %s10, 0
    %p97 = por %p95, %p96
    %p98 = scmp.ne.s32.totalorder %s90, %s92
    %p99 = scmp.eq.s32.totalorder %s15, 3
    %p100 = por %p98, %p99
    %p101 = scmp.ne.s32.totalorder %s92, %s93
    %p102 = scmp.eq.s32.totalorder %s15, 0
    %p103 = por %p101, %p102
    %p104 = scmp.ne.s32.totalorder %s92, %s93
    %p105 = scmp.eq.s32.totalorder %s16, 3
    %p106 = por %p104, %p105
    %p108 = scmp.ne.s32.totalorder %s93, %s107
    %p109 = scmp.eq.s32.totalorder %s16, 0
    %p110 = por %p108, %p109
    %s112 = sadd.s32 %s111, 1
    %p115 = scmp.eq.s32.totalorder %s10, 3
    %p116 = scmp.ne.s32.totalorder %s111, %s113
    %p117 = scmp.eq.s32.totalorder %s10, 0
    %p118 = por %p116, %p117
    %p119 = scmp.ne.s32.totalorder %s111, %s113
    %p120 = scmp.eq.s32.totalorder %s15, 3
    %p121 = por %p119, %p120
    %p122 = scmp.ne.s32.totalorder %s113, %s114
    %p123 = scmp.eq.s32.totalorder %s15, 0
    %p124 = por %p122, %p123
    %p125 = scmp.ne.s32.totalorder %s113, %s114
    %p126 = scmp.eq.s32.totalorder %s16, 3
    %p127 = por %p125, %p126
    %p129 = scmp.ne.s32.totalorder %s114, %s128
    %p130 = scmp.eq.s32.totalorder %s16, 0
    %p131 = por %p129, %p130
    %s132 = ssub.s32 %s17, %s29
    %s133 = ssub.s32 %s18, %s25
    %s134 = sor.u32 %s132, %s133
    %p135 = scmp.eq.s32.totalorder %s134, 0
    %s137 = sadd.s32 %s136, 1
    %s138 = scalar_select %p135, %s136, %s137
    %p141 = pneg %p135
    %p142 = scmp.eq.s32.totalorder %s10, 3
    %p143 = por %p141, %p142
    %p144 = scmp.ne.s32.totalorder %s136, %s139
    %p145 = scmp.eq.s32.totalorder %s10, 0
    %p146 = por %p144, %p145
    %p147 = scmp.ne.s32.totalorder %s136, %s139
    %p148 = scmp.eq.s32.totalorder %s15, 3
    %p149 = por %p147, %p148
    %p150 = scmp.ne.s32.totalorder %s139, %s140
    %p151 = scmp.eq.s32.totalorder %s15, 0
    %p152 = por %p150, %p151
    %p153 = scmp.ne.s32.totalorder %s139, %s140
    %p154 = scmp.eq.s32.totalorder %s16, 3
    %p155 = por %p153, %p154
    %p157 = scmp.ne.s32.totalorder %s140, %s156
    %p158 = scmp.eq.s32.totalorder %s16, 0
    %p159 = por %p157, %p158
    %p160 = scmp.le.s32.totalorder 1, %s10
    %p161 = scmp.lt.s32.totalorder %s10, 5
    %p162 = pnand %p160, %p161
    %p163 = pneg %p162
    // Predicated region
    $region9: #{residual_forward.1} parent=5 // pred_check
      _
    $region10: #{residual_forward.1} parent=5 // pred_check_branch
      %165 = sbr.rel (%p162) target = $region12
    $region11: #{residual_forward.1} parent=5 // pred_region
      %s166 = ssub.s32 %s10, 1
      // Predicated region
      $region13: #{residual_forward.1} parent=11 // pred_check
        %p167 = pneg %p103
      $region14: #{residual_forward.1} parent=11 // pred_check_branch
        %169 = sbr.rel (%p167) target = $region16
      $region15: #{residual_forward.1} parent=11 // pred_region
        _
      $region16: #{residual_forward.1} parent=11 // pred_fallthru
        _
      // Predicated region
      $region17: #{residual_forward.1} parent=11 // pred_check
        %p170 = pneg %p124
      $region18: #{residual_forward.1} parent=11 // pred_check_branch
        %172 = sbr.rel (%p170) target = $region20
      $region19: #{residual_forward.1} parent=11 // pred_region
        _
      $region20: #{residual_forward.1} parent=11 // pred_fallthru
        _
    $region12: #{residual_forward.1} parent=5 // pred_fallthru
      _
    %p173 = scmp.lt.s32.totalorder %s10, 4
    // Predicated region
    $region21: #{residual_forward.1} parent=5 // pred_check
      %p174 = pneg %p173
    $region22: #{residual_forward.1} parent=5 // pred_check_branch
      %176 = sbr.rel (%p174) target = $region24
    $region23: #{residual_forward.1} parent=5 // pred_region
      // Predicated region
      $region25: #{residual_forward.1} parent=23 // pred_check
        %p177 = pneg %p44
      $region26: #{residual_forward.1} parent=23 // pred_check_branch
        %179 = sbr.rel (%p177) target = $region28
      $region27: #{residual_forward.1} parent=23 // pred_region
        %s180 = smul.u32 4, %s18
        %s181 = ssub.s32 9, %s180
        %p182 = scmp.lt.s32.totalorder %s181, 4
        %s183 = scalar_select %p182, %s181, 4
        %s184 = smul.u32 64, %s183
        %s185 = smul.u32 %s184, 2
        %p186 = scmp.lt.s32.totalorder %s17, 1
        %s187 = scalar_select %p186, %s17, 1
        %p188 = scmp.lt.s32.totalorder %s180, 8
        %s189 = scalar_select %p188, %s180, 8
        %s190 = smul.addr %s189, 2
        %s191 = smul.addr %s187, 18
        %s192 = sadd.s32 %s190, %s191
        %s193 = smul.addr %s192, 4
        %s194 = scalar_lea.vmem %s0, %s193
        %s195 = smul.u32 4, %s18
        %s196 = ssub.s32 9, %s195
        %p197 = scmp.lt.s32.totalorder %s196, 4
        %s198 = scalar_select %p197, %s196, 4
        %s199 = smul.u32 64, %s198
        %s200 = smul.u32 %s199, 2
      $region28: #{residual_forward.1} parent=23 // pred_fallthru
        _
      // Predicated region
      $region29: #{residual_forward.1} parent=23 // pred_check
        %p201 = pneg %p76
      $region30: #{residual_forward.1} parent=23 // pred_check_branch
        %203 = sbr.rel (%p201) target = $region32
      $region31: #{residual_forward.1} parent=23 // pred_region
        %s204 = sadd.s32 %s18, 1
        %s205 = smul.u32 %s204, 4
        %p206 = scmp.lt.s32.totalorder %s17, 1
        %s207 = scalar_select %p206, %s17, 1
        %p208 = scmp.lt.s32.totalorder %s205, 8
        %s209 = scalar_select %p208, %s205, 8
        %s210 = smul.addr %s209, 2
        %s211 = smul.addr %s207, 18
        %s212 = sadd.s32 %s210, %s211
        %s213 = smul.addr %s212, 4
        %s214 = scalar_lea.vmem %s1, %s213
        %s215 = sadd.s32 %s18, 1
        %s216 = smul.u32 %s215, 4
      $region32: #{residual_forward.1} parent=23 // pred_fallthru
        _
    $region24: #{residual_forward.1} parent=5 // pred_fallthru
      _
    %p217 = scmp.le.s32.totalorder 1, %s10
    %p218 = scmp.lt.s32.totalorder %s10, 5
    %p219 = pnand %p217, %p218
    %p220 = pneg %p219
    // Predicated region
    $region33: #{residual_forward.1} parent=5 // pred_check
      _
    $region34: #{residual_forward.1} parent=5 // pred_check_branch
      %222 = sbr.rel (%p219) target = $region36
    $region35: #{residual_forward.1} parent=5 // pred_region
      %s223 = ssub.s32 %s10, 1
      %s224 = smul.u32 4, %s20
      %s225 = ssub.s32 9, %s224
      %p226 = scmp.lt.s32.totalorder %s225, 4
      %s227 = scalar_select %p226, %s225, 4
      %s228 = smul.u32 64, %s227
      %s229 = smul.u32 %s228, 2
      %p230 = scmp.lt.s32.totalorder %s19, 1
      %s231 = scalar_select %p230, %s19, 1
      %p232 = scmp.lt.s32.totalorder %s224, 8
      %s233 = scalar_select %p232, %s224, 8
      %s234 = smul.addr %s233, 2
      %s235 = smul.addr %s231, 18
      %s236 = sadd.s32 %s234, %s235
      %s237 = smul.addr %s236, 4
      %s238 = scalar_lea.vmem %s0, %s237
      %p239 = pneg %p50
      %p240 = pneg %p47
      %s241 = sadd.s32 %s20, 1
      %s242 = smul.u32 %s241, 4
      %p243 = scmp.lt.s32.totalorder %s19, 1
      %s244 = scalar_select %p243, %s19, 1
      %p245 = scmp.lt.s32.totalorder %s242, 8
      %s246 = scalar_select %p245, %s242, 8
      %s247 = smul.addr %s246, 2
      %s248 = smul.addr %s244, 18
      %s249 = sadd.s32 %s247, %s248
      %s250 = smul.addr %s249, 4
      %s251 = scalar_lea.vmem %s1, %s250
      %p252 = pneg %p82
      %p253 = pneg %p79
      %p254 = pneg %p103
      %p255 = pneg %p100
      %p256 = pneg %p124
      %p257 = pneg %p121
      %p258 = pneg %p152
      %p259 = pneg %p149
      %s260 = smul.u32 4, %s20
      %p261 = scmp.lt.s32.totalorder %s19, 1
      %s262 = scalar_select %p261, %s19, 1
      %p263 = scmp.lt.s32.totalorder %s260, 7
      %s264 = scalar_select %p263, %s260, 7
      %s265 = smul.addr %s262, 8
      %s266 = sadd.s32 %s264, %s265
      %s267 = smul.addr %s266, 8
      %s268 = scalar_lea.vmem %s4, %s267
      %s269 = smul.u32 4, %s20
      %s270 = ssub.s32 9, %s269
      %p271 = scmp.lt.s32.totalorder %s270, 4
      %s272 = scalar_select %p271, %s270, 4
      %s273 = smul.u32 64, %s272
      %s274 = smul.u32 %s273, 2
      %p275 = scmp.lt.s32.totalorder %s19, 1
      %s276 = scalar_select %p275, %s19, 1
      %p277 = scmp.lt.s32.totalorder %s269, 8
      %s278 = scalar_select %p277, %s269, 8
      %s279 = smul.addr %s278, 2
      %s280 = smul.addr %s276, 18
      %s281 = sadd.s32 %s279, %s280
      %s282 = smul.addr %s281, 4
      %s283 = scalar_lea.vmem %s0, %s282
      %s284 = smul.u32 4, %s20
      %s285 = ssub.s32 9, %s284
      %p286 = scmp.lt.s32.totalorder %s285, 4
      %s287 = scalar_select %p286, %s285, 4
      %s288 = smul.u32 64, %s287
      %s289 = smul.u32 %s288, 2
      %s290 = sadd.s32 %s20, 1
      %s291 = smul.u32 %s290, 4
      %p292 = scmp.lt.s32.totalorder %s19, 1
      %s293 = scalar_select %p292, %s19, 1
      %p294 = scmp.lt.s32.totalorder %s291, 8
      %s295 = scalar_select %p294, %s291, 8
      %s296 = smul.addr %s295, 2
      %s297 = smul.addr %s293, 18
      %s298 = sadd.s32 %s296, %s297
      %s299 = smul.addr %s298, 4
      %s300 = scalar_lea.vmem %s1, %s299
      %s301 = sadd.s32 %s20, 1
      %s302 = smul.u32 %s301, 4
      %s303 = smul.u32 4, %s20
      %p304 = scmp.lt.s32.totalorder %s19, 1
      %s305 = scalar_select %p304, %s19, 1
      %p306 = scmp.lt.s32.totalorder %s303, 7
      %s307 = scalar_select %p306, %s303, 7
      %s308 = smul.addr %s305, 8
      %s309 = sadd.s32 %s307, %s308
      %s310 = smul.addr %s309, 8
      %s311 = scalar_lea.vmem %s4, %s310
      %s312 = smul.u32 4, %s20
      %v314 = vld [vmem:[%s283] sm:$0xf]
      %v315 = vld [vmem:[%s283 + $0x4] sm:$0x1]
      %v316 = vld [vmem:[%s283 + $0x8] sm:$0xf]
      %v317 = vld [vmem:[%s283 + $0xc] sm:$0x1]
      %v318 = vld [vmem:[%s283 + $0x10] sm:$0xf]
      %v319 = vld [vmem:[%s283 + $0x14] sm:$0x1]
      %v320 = vld [vmem:[%s283 + $0x18] sm:$0xf]
      %v321 = vld [vmem:[%s283 + $0x1c] sm:$0x1]
      %v322 = vld [vmem:[%s300] sm:$0xf]
      %v323 = vld [vmem:[%s300 + $0x4] sm:$0x1]
      %v324 = vld [vmem:[%s2] sm:$0xf]
      %v325 = vld [vmem:[%s2 + $0x4] sm:$0xf]
      %vm326 = vsmask.f32 3328
      %vm327 = vsmask.f32 7440
      %vm328 = vmor %vm326, %vm327
      %v330 = vshrl.u32 %v314, 16
      %v332 = vrot.slane %v330, 4
      %v333 = vshll.u32 %v314, 16
      %v335 = vrot.slane %v333, 5
      %v336 = vor.u32 %v332, %v335
      %v337 = vrot.slane %v336, 4
      %v339 = vshll.u32 %v315, 16
      %v341 = vrot.slane %v339, 5
      %v342 = vsel %vm328, %v337, %v341
      %v344 = vshrl.u32 %v316, 16
      %v346 = vrot.slane %v344, 4
      %v347 = vshll.u32 %v316, 16
      %v349 = vrot.slane %v347, 5
      %v350 = vor.u32 %v346, %v349
      %v351 = vrot.slane %v350, 4
      %v353 = vshll.u32 %v317, 16
      %v355 = vrot.slane %v353, 5
      %v356 = vsel %vm328, %v351, %v355
      %v358 = vshrl.u32 %v318, 16
      %v360 = vrot.slane %v358, 4
      %v361 = vshll.u32 %v318, 16
      %v363 = vrot.slane %v361, 5
      %v364 = vor.u32 %v360, %v363
      %v365 = vrot.slane %v364, 4
      %v367 = vshll.u32 %v319, 16
      %v369 = vrot.slane %v367, 5
      %v370 = vsel %vm328, %v365, %v369
      %v372 = vshrl.u32 %v320, 16
      %v374 = vrot.slane %v372, 4
      %v375 = vshll.u32 %v320, 16
      %v377 = vrot.slane %v375, 5
      %v378 = vor.u32 %v374, %v377
      %v379 = vrot.slane %v378, 4
      %v381 = vshll.u32 %v321, 16
      %v383 = vrot.slane %v381, 5
      %v384 = vsel %vm328, %v379, %v383
      %s385 = scalar_lea.vmem %s2, 8
      %v386 = vld [vmem:[%s385] sm:$0xf]
      %v387 = vld [vmem:[%s385 + $0x4] sm:$0xf]
      %v388 = vunpack.c.l.b16 %v342
      %v389 = vunpack.c.l.b16 %v356
      %v390 = vunpack.c.l.b16 %v370
      %v391 = vunpack.c.l.b16 %v384
      %v392 = vpack.c.b16 %v389, %v388
      %v393 = vpack.c.b16 %v391, %v390
      %v396 = vunpack.c.l.b16 %v386
      %v397 = vunpack.c.l.b16 %v387
      %v398 = vpack.c.b16 %v397, %v396
      %vm400 = vcmask 130048
      %v402 = vsel %vm400, %v392, 0
      %v405 = vsel %vm400, %v393, 0
      %407 = vmatprep.subr.bf16.mxu0 0
      %408 = vmatpush1.bf16.msra.mxu0 0
      %409 = vmatprep.subr.bf16.mxu0 0
      %410 = vmatpush1.bf16.msra.mxu0 0
      %411 = vmatprep.subr.bf16.mxu0 0
      %412 = vmatpush1.bf16.msra.mxu0 0
      %413 = vmatprep.subr.bf16.mxu0 0
      %414 = vmatpush1.bf16.msra.mxu0 0
      %415 = vmatprep.subr.bf16.mxu0 0
      %416 = vmatpush1.bf16.msra.mxu0 0
      %417 = vmatprep.subr.bf16.mxu0 0
      %418 = vmatpush1.bf16.msra.mxu0 0
      %419 = vmatprep.subr.bf16.mxu0 0
      %420 = vmatpush1.bf16.msra.mxu0 0
      %421 = vmatprep.subr.bf16.mxu0 0
      %422 = vmatpush1.bf16.msra.mxu0 %v398
      %423 = vmatprep.subr.bf16.mxu0 0
      %424 = vmatpush2.bf16.msra.mxu0 0
      %425 = vmatprep.subr.bf16.mxu0 0
      %426 = vmatpush2.bf16.msra.mxu0 0
      %427 = vmatprep.subr.bf16.mxu0 0
      %428 = vmatpush2.bf16.msra.mxu0 0
      %429 = vmatprep.subr.bf16.mxu0 0
      %430 = vmatpush2.bf16.msra.mxu0 0
      %431 = vmatprep.subr.bf16.mxu0 0
      %432 = vmatpush2.bf16.msra.mxu0 0
      %433 = vmatprep.subr.bf16.mxu0 0
      %434 = vmatpush2.bf16.msra.mxu0 0
      %435 = vmatprep.subr.bf16.mxu0 0
      %436 = vmatpush2.bf16.msra.mxu0 0
      %437 = vmatprep.subr.bf16.mxu0 0
      %438 = vmatpush2.bf16.msra.mxu0 0
      %439 = vmatprep.mubr.bf16.mxu0 0
      %440 = vmatmul.mubr.bf16.gmra.mxu0 %v402
      %v441 = vpop.f32.mrf.mxu0
      %v442 = vadd.f32 0.0, %v441
      %v443 = vpop.f32.mrf.mxu0
      %v444 = vpop.f32.mrf.mxu0
      %v445 = vadd.f32 0.0, %v444
      %v446 = vpop.f32.mrf.mxu0
      %447 = vmatprep.mubr.bf16.mxu0 0
      %448 = vmatmul.mubr.bf16.gmra.mxu0 %v405
      %v449 = vpop.f32.mrf.mxu0
      %v450 = vadd.f32 0.0, %v449
      %v451 = vpop.f32.mrf.mxu0
      %v452 = vpop.f32.mrf.mxu0
      %v453 = vadd.f32 0.0, %v452
      %v454 = vpop.f32.mrf.mxu0
      %455 = vdwg.mxu0
      %v460 = vunpack.c.l.b16 %v314
      %v461 = vunpack.c.l.b16 %v316
      %v462 = vunpack.c.l.b16 %v318
      %v463 = vunpack.c.l.b16 %v320
      %v464 = vpack.c.b16 %v461, %v460
      %v465 = vpack.c.b16 %v463, %v462
      %v468 = vunpack.c.l.b16 %v324
      %v469 = vunpack.c.l.b16 %v325
      %v470 = vpack.c.b16 %v469, %v468
      %v473 = vsel %vm400, %v464, 0
      %v476 = vsel %vm400, %v465, 0
      %478 = vmatprep.subr.bf16.mxu0 0
      %479 = vmatpush1.bf16.msra.mxu0 0
      %480 = vmatprep.subr.bf16.mxu0 0
      %481 = vmatpush1.bf16.msra.mxu0 0
      %482 = vmatprep.subr.bf16.mxu0 0
      %483 = vmatpush1.bf16.msra.mxu0 0
      %484 = vmatprep.subr.bf16.mxu0 0
      %485 = vmatpush1.bf16.msra.mxu0 0
      %486 = vmatprep.subr.bf16.mxu0 0
      %487 = vmatpush1.bf16.msra.mxu0 0
      %488 = vmatprep.subr.bf16.mxu0 0
      %489 = vmatpush1.bf16.msra.mxu0 0
      %490 = vmatprep.subr.bf16.mxu0 0
      %491 = vmatpush1.bf16.msra.mxu0 0
      %492 = vmatprep.subr.bf16.mxu0 0
      %493 = vmatpush1.bf16.msra.mxu0 %v470
      %494 = vmatprep.subr.bf16.mxu0 0
      %495 = vmatpush2.bf16.msra.mxu0 0
      %496 = vmatprep.subr.bf16.mxu0 0
      %497 = vmatpush2.bf16.msra.mxu0 0
      %498 = vmatprep.subr.bf16.mxu0 0
      %499 = vmatpush2.bf16.msra.mxu0 0
      %500 = vmatprep.subr.bf16.mxu0 0
      %501 = vmatpush2.bf16.msra.mxu0 0
      %502 = vmatprep.subr.bf16.mxu0 0
      %503 = vmatpush2.bf16.msra.mxu0 0
      %504 = vmatprep.subr.bf16.mxu0 0
      %505 = vmatpush2.bf16.msra.mxu0 0
      %506 = vmatprep.subr.bf16.mxu0 0
      %507 = vmatpush2.bf16.msra.mxu0 0
      %508 = vmatprep.subr.bf16.mxu0 0
      %509 = vmatpush2.bf16.msra.mxu0 0
      %510 = vmatprep.mubr.bf16.mxu0 0
      %511 = vmatmul.mubr.bf16.gmra.mxu0 %v473
      %v512 = vpop.f32.mrf.mxu0
      %v513 = vadd.f32 %v442, %v512
      %v514 = vpop.f32.mrf.mxu0
      %v515 = vpop.f32.mrf.mxu0
      %v516 = vadd.f32 %v445, %v515
      %v517 = vpop.f32.mrf.mxu0
      %518 = vmatprep.mubr.bf16.mxu0 0
      %519 = vmatmul.mubr.bf16.gmra.mxu0 %v476
      %v520 = vpop.f32.mrf.mxu0
      %v521 = vadd.f32 %v450, %v520
      %v522 = vpop.f32.mrf.mxu0
      %v523 = vpop.f32.mrf.mxu0
      %v524 = vadd.f32 %v453, %v523
      %v525 = vpop.f32.mrf.mxu0
      %526 = vdwg.mxu0
      %s527 = scalar_lea.vmem %s2, 16
      %v528 = vld [vmem:[%s527] sm:$0xf]
      %v529 = vld [vmem:[%s527 + $0x4] sm:$0xf]
      %v531 = vunpack.c.l.b16 %v322
      %v532 = vpack.c.b16 %v462, %v461
      %v533 = vpack.c.b16 %v531, %v463
      %v536 = vunpack.c.l.b16 %v528
      %v537 = vunpack.c.l.b16 %v529
      %v538 = vpack.c.b16 %v537, %v536
      %v541 = vsel %vm400, %v532, 0
      %v544 = vsel %vm400, %v533, 0
      %546 = vmatprep.subr.bf16.mxu0 0
      %547 = vmatpush1.bf16.msra.mxu0 0
      %548 = vmatprep.subr.bf16.mxu0 0
      %549 = vmatpush1.bf16.msra.mxu0 0
      %550 = vmatprep.subr.bf16.mxu0 0
      %551 = vmatpush1.bf16.msra.mxu0 0
      %552 = vmatprep.subr.bf16.mxu0 0
      %553 = vmatpush1.bf16.msra.mxu0 0
      %554 = vmatprep.subr.bf16.mxu0 0
      %555 = vmatpush1.bf16.msra.mxu0 0
      %556 = vmatprep.subr.bf16.mxu0 0
      %557 = vmatpush1.bf16.msra.mxu0 0
      %558 = vmatprep.subr.bf16.mxu0 0
      %559 = vmatpush1.bf16.msra.mxu0 0
      %560 = vmatprep.subr.bf16.mxu0 0
      %561 = vmatpush1.bf16.msra.mxu0 %v538
      %562 = vmatprep.subr.bf16.mxu0 0
      %563 = vmatpush2.bf16.msra.mxu0 0
      %564 = vmatprep.subr.bf16.mxu0 0
      %565 = vmatpush2.bf16.msra.mxu0 0
      %566 = vmatprep.subr.bf16.mxu0 0
      %567 = vmatpush2.bf16.msra.mxu0 0
      %568 = vmatprep.subr.bf16.mxu0 0
      %569 = vmatpush2.bf16.msra.mxu0 0
      %570 = vmatprep.subr.bf16.mxu0 0
      %571 = vmatpush2.bf16.msra.mxu0 0
      %572 = vmatprep.subr.bf16.mxu0 0
      %573 = vmatpush2.bf16.msra.mxu0 0
      %574 = vmatprep.subr.bf16.mxu0 0
      %575 = vmatpush2.bf16.msra.mxu0 0
      %576 = vmatprep.subr.bf16.mxu0 0
      %577 = vmatpush2.bf16.msra.mxu0 0
      %578 = vmatprep.mubr.bf16.mxu0 0
      %579 = vmatmul.mubr.bf16.gmra.mxu0 %v541
      %v580 = vpop.f32.mrf.mxu0
      %v581 = vadd.f32 0.0, %v580
      %v582 = vpop.f32.mrf.mxu0
      %v583 = vpop.f32.mrf.mxu0
      %v584 = vadd.f32 0.0, %v583
      %v585 = vpop.f32.mrf.mxu0
      %586 = vmatprep.mubr.bf16.mxu0 0
      %587 = vmatmul.mubr.bf16.gmra.mxu0 %v544
      %v588 = vpop.f32.mrf.mxu0
      %v589 = vadd.f32 0.0, %v588
      %v590 = vpop.f32.mrf.mxu0
      %v591 = vpop.f32.mrf.mxu0
      %v592 = vadd.f32 0.0, %v591
      %v593 = vpop.f32.mrf.mxu0
      %594 = vdwg.mxu0
      %v595 = vadd.f32 %v513, %v581
      %v596 = vadd.f32 %v516, %v584
      %v597 = vadd.f32 %v521, %v589
      %v598 = vadd.f32 %v524, %v592
      %v600 = vshrl.u32 %v322, 16
      %v602 = vrot.slane %v600, 4
      %v603 = vshll.u32 %v322, 16
      %v605 = vrot.slane %v603, 5
      %v606 = vor.u32 %v602, %v605
      %v607 = vrot.slane %v606, 4
      %v609 = vshll.u32 %v323, 16
      %v611 = vrot.slane %v609, 5
      %v612 = vsel %vm328, %v607, %v611
      %s613 = scalar_lea.vmem %s2, 24
      %v614 = vld [vmem:[%s613] sm:$0xf]
      %v615 = vld [vmem:[%s613 + $0x4] sm:$0xf]
      %v616 = vunpack.c.l.b16 %v612
      %v617 = vpack.c.b16 %v390, %v389
      %v618 = vpack.c.b16 %v616, %v391
      %v621 = vunpack.c.l.b16 %v614
      %v622 = vunpack.c.l.b16 %v615
      %v623 = vpack.c.b16 %v622, %v621
      %v626 = vsel %vm400, %v617, 0
      %v629 = vsel %vm400, %v618, 0
      %631 = vmatprep.subr.bf16.mxu0 0
      %632 = vmatpush1.bf16.msra.mxu0 0
      %633 = vmatprep.subr.bf16.mxu0 0
      %634 = vmatpush1.bf16.msra.mxu0 0
      %635 = vmatprep.subr.bf16.mxu0 0
      %636 = vmatpush1.bf16.msra.mxu0 0
      %637 = vmatprep.subr.bf16.mxu0 0
      %638 = vmatpush1.bf16.msra.mxu0 0
      %639 = vmatprep.subr.bf16.mxu0 0
      %640 = vmatpush1.bf16.msra.mxu0 0
      %641 = vmatprep.subr.bf16.mxu0 0
      %642 = vmatpush1.bf16.msra.mxu0 0
      %643 = vmatprep.subr.bf16.mxu0 0
      %644 = vmatpush1.bf16.msra.mxu0 0
      %645 = vmatprep.subr.bf16.mxu0 0
      %646 = vmatpush1.bf16.msra.mxu0 %v623
      %647 = vmatprep.subr.bf16.mxu0 0
      %648 = vmatpush2.bf16.msra.mxu0 0
      %649 = vmatprep.subr.bf16.mxu0 0
      %650 = vmatpush2.bf16.msra.mxu0 0
      %651 = vmatprep.subr.bf16.mxu0 0
      %652 = vmatpush2.bf16.msra.mxu0 0
      %653 = vmatprep.subr.bf16.mxu0 0
      %654 = vmatpush2.bf16.msra.mxu0 0
      %655 = vmatprep.subr.bf16.mxu0 0
      %656 = vmatpush2.bf16.msra.mxu0 0
      %657 = vmatprep.subr.bf16.mxu0 0
      %658 = vmatpush2.bf16.msra.mxu0 0
      %659 = vmatprep.subr.bf16.mxu0 0
      %660 = vmatpush2.bf16.msra.mxu0 0
      %661 = vmatprep.subr.bf16.mxu0 0
      %662 = vmatpush2.bf16.msra.mxu0 0
      %663 = vmatprep.mubr.bf16.mxu0 0
      %664 = vmatmul.mubr.bf16.gmra.mxu0 %v626
      %v665 = vpop.f32.mrf.mxu0
      %v666 = vadd.f32 0.0, %v665
      %v667 = vpop.f32.mrf.mxu0
      %v668 = vpop.f32.mrf.mxu0
      %v669 = vadd.f32 0.0, %v668
      %v670 = vpop.f32.mrf.mxu0
      %671 = vmatprep.mubr.bf16.mxu0 0
      %672 = vmatmul.mubr.bf16.gmra.mxu0 %v629
      %v673 = vpop.f32.mrf.mxu0
      %v674 = vadd.f32 0.0, %v673
      %v675 = vpop.f32.mrf.mxu0
      %v676 = vpop.f32.mrf.mxu0
      %v677 = vadd.f32 0.0, %v676
      %v678 = vpop.f32.mrf.mxu0
      %679 = vdwg.mxu0
      %v680 = vadd.f32 %v595, %v666
      %v681 = vadd.f32 %v596, %v669
      %v682 = vadd.f32 %v597, %v674
      %v683 = vadd.f32 %v598, %v677
      %v684 = vld [vmem:[%s3] sm:$0x1]
      %v686 = vlaneseq
      %v687 = vshrl.u32 %v686, 7
      %v688 = vsub.s32 0, %v687
      %v689 = vrot.slane %v684, %v688
      %v691 = vadd.f32 %v680, %v689
      %v692 = vadd.f32 %v681, %v689
      %v693 = vadd.f32 %v682, %v689
      %v694 = vadd.f32 %v683, %v689
      %vm695 = vcmask 64512
      %696 = vst.msk [vmem:[%s311] sm:$0xff] %vm695, %v691
      %697 = vst.msk [vmem:[%s311 + $0x8] sm:$0xff] %vm695, %v692
      %698 = vst.msk [vmem:[%s311 + $0x10] sm:$0xff] %vm695, %v693
      %699 = vst.msk [vmem:[%s311 + $0x18] sm:$0xff] %vm695, %v694
      %s700 = smul.u32 4, %s20
      %p701 = scmp.lt.s32.totalorder %s19, 1
      %s702 = scalar_select %p701, %s19, 1
      %p703 = scmp.lt.s32.totalorder %s700, 7
      %s704 = scalar_select %p703, %s700, 7
      %s705 = smul.addr %s702, 8
      %s706 = sadd.s32 %s704, %s705
      %s707 = smul.addr %s706, 8
      %s708 = scalar_lea.vmem %s4, %s707
      // Predicated region
      $region37: #{residual_forward.1} parent=35 // pred_check
        %p709 = pneg %p149
      $region38: #{residual_forward.1} parent=35 // pred_check_branch
        %711 = sbr.rel (%p709) target = $region40
      $region39: #{residual_forward.1} parent=35 // pred_region
        %s712 = smul.u32 4, %s20
      $region40: #{residual_forward.1} parent=35 // pred_fallthru
        _
    $region36: #{residual_forward.1} parent=5 // pred_fallthru
      _
    %p713 = scmp.le.s32.totalorder 2, %s10
    // Predicated region
    $region41: #{residual_forward.1} parent=5 // pred_check
      %p714 = pneg %p713
    $region42: #{residual_forward.1} parent=5 // pred_check_branch
      %716 = sbr.rel (%p714) target = $region44
    $region43: #{residual_forward.1} parent=5 // pred_region
      %s717 = ssub.s32 %s10, 2
      // Predicated region
      $region45: #{residual_forward.1} parent=43 // pred_check
        %p718 = pneg %p155
      $region46: #{residual_forward.1} parent=43 // pred_check_branch
        %720 = sbr.rel (%p718) target = $region48
      $region47: #{residual_forward.1} parent=43 // pred_region
        %s721 = smul.u32 4, %s22
        %p722 = scmp.lt.s32.totalorder %s21, 1
        %s723 = scalar_select %p722, %s21, 1
        %p724 = scmp.lt.s32.totalorder %s721, 7
        %s725 = scalar_select %p724, %s721, 7
        %s726 = smul.addr %s723, 8
        %s727 = sadd.s32 %s725, %s726
        %s728 = smul.addr %s727, 8
        %s729 = scalar_lea.vmem %s4, %s728
      $region48: #{residual_forward.1} parent=43 // pred_fallthru
        _
    $region44: #{residual_forward.1} parent=5 // pred_fallthru
      _
  $region6: #{residual_forward.1} parent=0 // loop_footer
    %s14 = sadd.s32 1, %s10
  $region7: #{residual_forward.1} parent=0 // loop_footer_branch
    %9 = sbr.rel target = $region3
  $region8: #{residual_forward.1} parent=0 // loop_exit
    _

</llo_original>
